<compile_context>
chip_gen: v5e
topology: v5e:2x2
jax: 0.10.0
libtpu: 0.0.40
codegen_flags: <defaults>
</compile_context>

<pallas_src>
import functools

import jax
import jax.numpy as jnp
from jax.experimental import pallas as pl
from jax.experimental.pallas import tpu as pltpu

LANE = 128      # TPU lane width (last dim)
SUBLANE = 8     # TPU sublane width (second-to-last dim, f32)


def _round_up(n, m):
    return ((n + m - 1) // m) * m


# ----------------------------------------------------------------------------
# Fused MLP kernel: whole (Linear+ReLU)* + Linear chain in one body.
# refs = (w1, b1, w2, b2, ..., wn, bn, out_ref).
#   x_ref : (TB, d_in)            compute_dtype (bf16)
#   w_i   : (in_i, out_i)         compute_dtype, VMEM-resident
#   b_i   : (1, out_i)            f32, VMEM-resident
#   o_ref : (TB, num_classes)     out dtype
# ----------------------------------------------------------------------------
def _mlp_kernel(x_ref, *refs, num_layers, compute_dtype):
    o_ref = refs[-1]
    h = x_ref[...]                                    # bf16 activation stream
    for i in range(num_layers):
        w = refs[2 * i][...]
        b = refs[2 * i + 1][...]
        # bf16 MXU matmul with f32 accumulation; bias/ReLU on the f32 acc.
        acc = jnp.dot(h, w, preferred_element_type=jnp.float32) + b
        if i < num_layers - 1:                        # last layer: no activation
            h = jnp.maximum(acc, 0.0).astype(compute_dtype)
        else:
            h = acc
    o_ref[...] = h.astype(o_ref.dtype)


# ----------------------------------------------------------------------------
# Forward: one fused pallas_call, batch-tiled grid, resident weights.
# ----------------------------------------------------------------------------
def fully_connected_forward(params, x, *, batch_tile=1024,
                            compute_dtype=jnp.bfloat16):
    """Equivalent to FullyConnectedNN.forward: (Linear+ReLU)* then Linear."""
    B, d_in = x.shape
    num_layers = len(params)
    dims = [d_in] + [w.shape[1] for (w, _) in params]

    # Per-layer in/out widths as seen by the kernel:
    #   input dim of layer 0 and output dim of the last layer stay UNPADDED
    #   (they are streamed / written to HBM); hidden dims are lane-padded to
    #   128 so intermediate activations + resident weights are lane-dense.
    kdims = [dims[0]] + [_round_up(d, LANE) for d in dims[1:-1]] + [dims[-1]]

    # --- batch tiling: multiple of 8, minimal over-padding, >=2 steps when big
    b8 = _round_up(B, SUBLANE)
    batch_tile = max(SUBLANE, _round_up(batch_tile, SUBLANE))
    n_steps = pl.cdiv(b8, batch_tile)
    if n_steps == 1 and b8 >= 2 * LANE:      # give v7x's 2nd TensorCore work
        n_steps = 2
    tb = _round_up(pl.cdiv(b8, n_steps), SUBLANE)
    b_pad = n_steps * tb
    grid = (n_steps,)

    out_dtype = x.dtype

    # --- inputs: bf16 activation stream; pad batch rows only if needed.
    x_c = x.astype(compute_dtype)
    if b_pad != B:
        x_c = jnp.zeros((b_pad, d_in), compute_dtype).at[:B].set(x_c)

    # --- parameters: zero-pad hidden dims (zero rows/cols contribute nothing,
    # so the padded math equals the unpadded computation exactly).
    padded = []
    for i, (w, b) in enumerate(params):
        din_k, dout_k = kdims[i], kdims[i + 1]
        w_p = (jnp.zeros((din_k, dout_k), compute_dtype)
               .at[: dims[i], : dims[i + 1]].set(w.astype(compute_dtype)))
        b_p = (jnp.zeros((1, dout_k), jnp.float32)
               .at[0, : dims[i + 1]].set(b.astype(jnp.float32)))
        padded += [w_p, b_p]

    # --- BlockSpecs: x/out stream over the batch grid; weights/biases resident.
    in_specs = [pl.BlockSpec((tb, d_in), lambda i: (i, 0))]
    for li in range(num_layers):
        in_specs.append(pl.BlockSpec((kdims[li], kdims[li + 1]), lambda i: (0, 0)))
        in_specs.append(pl.BlockSpec((1, kdims[li + 1]), lambda i: (0, 0)))
    out_spec = pl.BlockSpec((tb, dims[-1]), lambda i: (i, 0))

    flops = 2 * b_pad * sum(kdims[i] * kdims[i + 1] for i in range(num_layers))
    bytes_accessed = (
        x_c.size * x_c.dtype.itemsize
        + sum(p.size * p.dtype.itemsize for p in padded)
        + b_pad * dims[-1] * jnp.dtype(out_dtype).itemsize
    )
    cost = pl.CostEstimate(flops=flops, transcendentals=0,
                           bytes_accessed=bytes_accessed)

    kernel = functools.partial(_mlp_kernel, num_layers=num_layers,
                               compute_dtype=compute_dtype)

    out_p = pl.pallas_call(
        kernel,
        out_shape=jax.ShapeDtypeStruct((b_pad, dims[-1]), out_dtype),
        grid=grid,
        in_specs=in_specs,
        out_specs=out_spec,
        compiler_params=pltpu.CompilerParams(
            dimension_semantics=("parallel",)),      # megacore shard on v7x
        cost_estimate=cost,
    )(x_c, *padded)

    return out_p[:B] if b_pad != B else out_p


# ----------------------------------------------------------------------------
# Parameter init (mirrors torch.nn.Linear default: U(-1/sqrt(in), 1/sqrt(in)))
# ----------------------------------------------------------------------------
def init_fully_connected(key, layers_size, num_classes, dtype=jnp.float32):
    dims = list(layers_size) + [num_classes]
    params = []
    for i in range(1, len(dims)):
        din, dout = dims[i - 1], dims[i]
        key, kw, kb = jax.random.split(key, 3)
        bound = 1.0 / jnp.sqrt(jnp.float32(din))
        w = jax.random.uniform(kw, (din, dout), dtype, -bound, bound)
        b = jax.random.uniform(kb, (dout,), dtype, -bound, bound)
        params.append((w, b))
    return params


# ----------------------------------------------------------------------------
# Demo / smoke test
# ----------------------------------------------------------------------------
if __name__ == "__main__":
    # FullyConnectedNN(layers_size=[32, 64, 48], num_classes=10)
    # TODO(synk): only ReLU (the default activation_type) is implemented.
    layers_size = [32, 64, 48]
    num_classes = 10
    batch = 8

    key = jax.random.PRNGKey(0)
    key, kx = jax.random.split(key)
    x = jax.random.normal(kx, (batch, layers_size[0]), jnp.float32)

    params = init_fully_connected(key, layers_size, num_classes)

    out = fully_connected_forward(params, x)
    out = jax.block_until_ready(out)

    # Reference with the same precision path (bf16 inputs, f32 accumulation).
    ref = x.astype(jnp.bfloat16)
    for i, (w, b) in enumerate(params):
        acc = jnp.dot(ref, w.astype(jnp.bfloat16),
                      preferred_element_type=jnp.float32) + b.astype(jnp.float32)
        if i < len(params) - 1:
            ref = jnp.maximum(acc, 0.0).astype(jnp.bfloat16)
        else:
            ref = acc
    ref = ref.astype(x.dtype)

    assert out.shape == (batch, num_classes), out.shape
    assert jnp.allclose(out, ref, atol=2e-3, rtol=2e-3), "mismatch vs reference"

    print("KERNEL_OK")
</pallas_src>

<mosaic_0001>
module attributes {stable_mosaic.version = 11 : i64} {
  func.func @_mlp_kernel(%arg0: i32, %arg1: memref<8x32xbf16, #tpu.memory_space<vmem>>, %arg2: memref<32x128xbf16, #tpu.memory_space<vmem>>, %arg3: memref<1x128xf32, #tpu.memory_space<vmem>>, %arg4: memref<128x128xbf16, #tpu.memory_space<vmem>>, %arg5: memref<1x128xf32, #tpu.memory_space<vmem>>, %arg6: memref<128x10xbf16, #tpu.memory_space<vmem>>, %arg7: memref<1x10xf32, #tpu.memory_space<vmem>>, %arg8: memref<8x10xf32, #tpu.memory_space<vmem>>) attributes {dimension_semantics = [#tpu.dimension_semantics<parallel>], iteration_bounds = array<i64: 1>, scalar_prefetch = 0 : i64, scratch_operands = 0 : i64, tpu.core_type = #tpu.core_type<tc>, window_params = [{transform_indices = @transform_0, window_bounds = array<i64: 8, 32>}, {pipeline_mode = #tpu.pipeline_mode<synchronous>, transform_indices = @transform_1, window_bounds = array<i64: 32, 128>}, {pipeline_mode = #tpu.pipeline_mode<synchronous>, transform_indices = @transform_2, window_bounds = array<i64: 1, 128>}, {pipeline_mode = #tpu.pipeline_mode<synchronous>, transform_indices = @transform_3, window_bounds = array<i64: 128, 128>}, {pipeline_mode = #tpu.pipeline_mode<synchronous>, transform_indices = @transform_4, window_bounds = array<i64: 1, 128>}, {pipeline_mode = #tpu.pipeline_mode<synchronous>, transform_indices = @transform_5, window_bounds = array<i64: 128, 10>}, {pipeline_mode = #tpu.pipeline_mode<synchronous>, transform_indices = @transform_6, window_bounds = array<i64: 1, 10>}, {transform_indices = @transform_7, window_bounds = array<i64: 8, 10>}]} {
    %c0 = arith.constant 0 : index
    %c0_0 = arith.constant 0 : index
    %0 = vector.load %arg1[%c0, %c0_0] : memref<8x32xbf16, #tpu.memory_space<vmem>>, vector<8x32xbf16>
    %c0_1 = arith.constant 0 : index
    %c0_2 = arith.constant 0 : index
    %1 = vector.load %arg2[%c0_1, %c0_2] : memref<32x128xbf16, #tpu.memory_space<vmem>>, vector<32x128xbf16>
    %c0_3 = arith.constant 0 : index
    %c0_4 = arith.constant 0 : index
    %2 = vector.load %arg3[%c0_3, %c0_4] : memref<1x128xf32, #tpu.memory_space<vmem>>, vector<1x128xf32>
    %cst = arith.constant dense<0.000000e+00> : vector<8x128xf32>
    %3 = tpu.matmul %0, %1, %cst {dimension_numbers = #tpu.dot_dimension_numbers<[1], [0], [0], [1], [0, 0, 1, 1], [], []>} : vector<8x32xbf16>, vector<32x128xbf16>, vector<8x128xf32> -> vector<8x128xf32>
    %4 = vector.broadcast %2 : vector<1x128xf32> to vector<8x128xf32>
    %5 = arith.addf %3, %4 : vector<8x128xf32>
    %cst_5 = arith.constant 0.000000e+00 : f32
    %6 = vector.broadcast %cst_5 : f32 to vector<8x128xf32>
    %7 = arith.maximumf %5, %6 : vector<8x128xf32>
    %8 = arith.truncf %7 : vector<8x128xf32> to vector<8x128xbf16>
    %c0_6 = arith.constant 0 : index
    %c0_7 = arith.constant 0 : index
    %9 = vector.load %arg4[%c0_6, %c0_7] : memref<128x128xbf16, #tpu.memory_space<vmem>>, vector<128x128xbf16>
    %c0_8 = arith.constant 0 : index
    %c0_9 = arith.constant 0 : index
    %10 = vector.load %arg5[%c0_8, %c0_9] : memref<1x128xf32, #tpu.memory_space<vmem>>, vector<1x128xf32>
    %cst_10 = arith.constant dense<0.000000e+00> : vector<8x128xf32>
    %11 = tpu.matmul %8, %9, %cst_10 {dimension_numbers = #tpu.dot_dimension_numbers<[1], [0], [0], [1], [0, 0, 1, 1], [], []>} : vector<8x128xbf16>, vector<128x128xbf16>, vector<8x128xf32> -> vector<8x128xf32>
    %12 = vector.broadcast %10 : vector<1x128xf32> to vector<8x128xf32>
    %13 = arith.addf %11, %12 : vector<8x128xf32>
    %cst_11 = arith.constant 0.000000e+00 : f32
    %14 = vector.broadcast %cst_11 : f32 to vector<8x128xf32>
    %15 = arith.maximumf %13, %14 : vector<8x128xf32>
    %16 = arith.truncf %15 : vector<8x128xf32> to vector<8x128xbf16>
    %c0_12 = arith.constant 0 : index
    %c0_13 = arith.constant 0 : index
    %17 = vector.load %arg6[%c0_12, %c0_13] : memref<128x10xbf16, #tpu.memory_space<vmem>>, vector<128x10xbf16>
    %c0_14 = arith.constant 0 : index
    %c0_15 = arith.constant 0 : index
    %18 = vector.load %arg7[%c0_14, %c0_15] : memref<1x10xf32, #tpu.memory_space<vmem>>, vector<1x10xf32>
    %cst_16 = arith.constant dense<0.000000e+00> : vector<8x10xf32>
    %19 = tpu.matmul %16, %17, %cst_16 {dimension_numbers = #tpu.dot_dimension_numbers<[1], [0], [0], [1], [0, 0, 1, 1], [], []>} : vector<8x128xbf16>, vector<128x10xbf16>, vector<8x10xf32> -> vector<8x10xf32>
    %20 = vector.broadcast %18 : vector<1x10xf32> to vector<8x10xf32>
    %21 = arith.addf %19, %20 : vector<8x10xf32>
    %c0_17 = arith.constant 0 : index
    %c0_18 = arith.constant 0 : index
    %22 = vector.load %arg8[%c0_17, %c0_18] : memref<8x10xf32, #tpu.memory_space<vmem>>, vector<8x10xf32>
    tpu.vector_store %arg8[%c0_17, %c0_18], %21 {strides = array<i32>} : memref<8x10xf32, #tpu.memory_space<vmem>>, vector<8x10xf32>,
    return
  }
  func.func @transform_0(%arg0: i32) -> (i32, i32) {
    %c0_i32 = arith.constant 0 : i32
    %c0_i32_0 = arith.constant 0 : i32
    return %arg0, %c0_i32 : i32, i32
  }
  func.func @transform_1(%arg0: i32) -> (i32, i32) {
    %c0_i32 = arith.constant 0 : i32
    %c0_i32_0 = arith.constant 0 : i32
    %c0_i32_1 = arith.constant 0 : i32
    return %c0_i32, %c0_i32_0 : i32, i32
  }
  func.func @transform_2(%arg0: i32) -> (i32, i32) {
    %c0_i32 = arith.constant 0 : i32
    %c0_i32_0 = arith.constant 0 : i32
    %c0_i32_1 = arith.constant 0 : i32
    return %c0_i32, %c0_i32_0 : i32, i32
  }
  func.func @transform_3(%arg0: i32) -> (i32, i32) {
    %c0_i32 = arith.constant 0 : i32
    %c0_i32_0 = arith.constant 0 : i32
    %c0_i32_1 = arith.constant 0 : i32
    return %c0_i32, %c0_i32_0 : i32, i32
  }
  func.func @transform_4(%arg0: i32) -> (i32, i32) {
    %c0_i32 = arith.constant 0 : i32
    %c0_i32_0 = arith.constant 0 : i32
    %c0_i32_1 = arith.constant 0 : i32
    return %c0_i32, %c0_i32_0 : i32, i32
  }
  func.func @transform_5(%arg0: i32) -> (i32, i32) {
    %c0_i32 = arith.constant 0 : i32
    %c0_i32_0 = arith.constant 0 : i32
    %c0_i32_1 = arith.constant 0 : i32
    return %c0_i32, %c0_i32_0 : i32, i32
  }
  func.func @transform_6(%arg0: i32) -> (i32, i32) {
    %c0_i32 = arith.constant 0 : i32
    %c0_i32_0 = arith.constant 0 : i32
    %c0_i32_1 = arith.constant 0 : i32
    return %c0_i32, %c0_i32_0 : i32, i32
  }
  func.func @transform_7(%arg0: i32) -> (i32, i32) {
    %c0_i32 = arith.constant 0 : i32
    %c0_i32_0 = arith.constant 0 : i32
    return %arg0, %c0_i32 : i32, i32
  }
}

</mosaic_0001>

<llo_original>
// kernel: tpu_custom_call.1
$region0: #{tpu_custom_call.1}
  #allocation0 [shape = 'u32[]', space=smem, size = 0x4, offset = 0x4, fixed_abs, tag = 'smem constant byte address 0x4 - core index']
  #allocation1 [shape = 'u32[72,128]{1,0:T(1,128)}', space=vmem, size = 0x9000, scoped, tag = 'internal scratch']
  %s0 = inlined_call_operand.vmem [shape: bf16[8,32], index: 0, kind: input, shape index: {}]
  %s1 = inlined_call_operand.hbm [shape: bf16[32,128], index: 1, kind: input, shape index: {}]
  %s2 = inlined_call_operand.vmem [shape: f32[1,128], index: 2, kind: input, shape index: {}]
  %s3 = inlined_call_operand.vmem [shape: bf16[128,128], index: 3, kind: input, shape index: {}]
  %s4 = inlined_call_operand.vmem [shape: f32[1,128], index: 4, kind: input, shape index: {}]
  %s5 = inlined_call_operand.vmem [shape: bf16[128,10], index: 5, kind: input, shape index: {}]
  %s6 = inlined_call_operand.vmem [shape: f32[1,10], index: 6, kind: input, shape index: {}]
  %s7 = inlined_call_operand.hbm [shape: f32[8,10], index: 7, kind: output, shape index: {}]
  %s8 = sld [smem:[#allocation0]]
  $region42: #{tpu_custom_call.1} parent=0
    _
  %s10 = ssub.s32 1, %s8
  %s11 = scalar_select 0, %s10, %s8
  $region1: #{tpu_custom_call.1} parent=0
    #allocation2 [shape = 'u8[8192]{0}', space=vmem, size = 0x2000, scoped, tag = 'input window, operand 1, single buffered']
    #allocation3 [shape = 's32[1]{0}', space=sflag, size = 0x4, scoped, tag = 'scoped memory for tpu_custom_call.1']
    #allocation4 [shape = 's32[1]{0}', space=sflag, size = 0x4, scoped, tag = 'scoped memory for tpu_custom_call.1']
    #allocation5 [shape = 'u8[4096]{0}', space=vmem, size = 0x1000, scoped, tag = 'output window, operand 0, single buffered']
    %12 = vsyncpa [#allocation3], 0
    %13 = vsyncpa [#allocation4], 0
    // Predicated region
    $region2: #{tpu_custom_call.1} parent=1 // pred_check
      _
    $region3: #{tpu_custom_call.1} parent=1 // pred_check_branch
      %15 = sbr.rel (0) target = $region5
    $region4: #{tpu_custom_call.1} parent=1 // pred_region
      _
    $region5: #{tpu_custom_call.1} parent=1 // pred_fallthru
      _
    // Predicated region
    $region6: #{tpu_custom_call.1} parent=1 // pred_check
      _
    $region7: #{tpu_custom_call.1} parent=1 // pred_check_branch
      %17 = sbr.rel (0) target = $region9
    $region8: #{tpu_custom_call.1} parent=1 // pred_region
      %19 = vsyncadd [#allocation3], 0
      %s20 = sshll.u32 %s1, 4
      %s21 = int_to_ptr.hbm [resolvable:$true] %s20
      %s22 = sshll.u32 [#allocation2], 4
      %s23 = int_to_ptr.vmem [resolvable:$true] %s22
      %28 = dma.hbm_to_vmem [thread:$0]  %s21, 256, %s23, [#allocation3], 64, 64, 4
    $region9: #{tpu_custom_call.1} parent=1 // pred_fallthru
      _
    // Predicated region
    $region10: #{tpu_custom_call.1} parent=1 // pred_check
      _
    $region11: #{tpu_custom_call.1} parent=1 // pred_check_branch
      %30 = sbr.rel (0) target = $region13
    $region12: #{tpu_custom_call.1} parent=1 // pred_region
      _
    $region13: #{tpu_custom_call.1} parent=1 // pred_fallthru
      _
    // Predicated region
    $region14: #{tpu_custom_call.1} parent=1 // pred_check
      _
    $region15: #{tpu_custom_call.1} parent=1 // pred_check_branch
      %32 = sbr.rel (0) target = $region17
    $region16: #{tpu_custom_call.1} parent=1 // pred_region
      _
    $region17: #{tpu_custom_call.1} parent=1 // pred_fallthru
      _
    // Predicated region
    $region18: #{tpu_custom_call.1} parent=1 // pred_check
      _
    $region19: #{tpu_custom_call.1} parent=1 // pred_check_branch
      %34 = sbr.rel (0) target = $region21
    $region20: #{tpu_custom_call.1} parent=1 // pred_region
      _
    $region21: #{tpu_custom_call.1} parent=1 // pred_fallthru
      _
    // Predicated region
    $region22: #{tpu_custom_call.1} parent=1 // pred_check
      _
    $region23: #{tpu_custom_call.1} parent=1 // pred_check_branch
      %36 = sbr.rel (0) target = $region25
    $region24: #{tpu_custom_call.1} parent=1 // pred_region
      _
    $region25: #{tpu_custom_call.1} parent=1 // pred_fallthru
      _
    // Predicated region
    $region26: #{tpu_custom_call.1} parent=1 // pred_check
      _
    $region27: #{tpu_custom_call.1} parent=1 // pred_check_branch
      %38 = sbr.rel (0) target = $region29
    $region28: #{tpu_custom_call.1} parent=1 // pred_region
      _
    $region29: #{tpu_custom_call.1} parent=1 // pred_fallthru
      _
    // Predicated region
    $region30: #{tpu_custom_call.1} parent=1 // pred_check
      _
    $region31: #{tpu_custom_call.1} parent=1 // pred_check_branch
      %40 = sbr.rel (0) target = $region33
    $region32: #{tpu_custom_call.1} parent=1 // pred_region
      %42 = dma.done [#allocation3], 256
    $region33: #{tpu_custom_call.1} parent=1 // pred_fallthru
      _
    %v44 = vld [vmem:[%s0] sm:$0xf]
    %v45 = vld [vmem:[#allocation2] sm:$0xf]
    %v46 = vld [vmem:[#allocation2 + $0x4] sm:$0xf]
    %v47 = vld [vmem:[#allocation2 + $0x8] sm:$0xf]
    %v48 = vld [vmem:[#allocation2 + $0xc] sm:$0xf]
    %v49 = vld [vmem:[%s2] sm:$0x1]
    %v51 = vperm.slane %v49, 0
    %v57 = vunpack.c.l.b16 %v45
    %v58 = vunpack.c.l.b16 %v46
    %v59 = vunpack.c.l.b16 %v47
    %v60 = vunpack.c.l.b16 %v48
    %v61 = vpack.c.b16 %v58, %v57
    %v62 = vpack.c.b16 %v60, %v59
    %vm65 = vcmask 261120
    %v67 = vsel %vm65, %v44, 0
    %69 = vmatpush.bf16.msra.mxu0 0
    %70 = vmatpush.bf16.msra.mxu0 0
    %71 = vmatpush.bf16.msra.mxu0 0
    %72 = vmatpush.bf16.msra.mxu0 0
    %73 = vmatpush.bf16.msra.mxu0 0
    %74 = vmatpush.bf16.msra.mxu0 0
    %75 = vmatpush.bf16.msra.mxu0 %v62
    %76 = vmatpush.bf16.msra.mxu0 %v61
    %77 = vmatmul.bf16.gmra.mxu0 %v67
    %v78 = vpop.f32.mrf.mxu0
    %v79 = vadd.f32 %v51, %v78
    %v80 = vpop.f32.mrf.mxu0
    %81 = vdwg.mxu0
    %v82 = vmax.f32 %v79, 0.0
    %v83 = vpack.c.bf16 %v82, %v82
    %v84 = vld [vmem:[%s3] sm:$0xf]
    %v85 = vld [vmem:[%s3 + $0x4] sm:$0xf]
    %v86 = vld [vmem:[%s3 + $0x8] sm:$0xf]
    %v87 = vld [vmem:[%s3 + $0xc] sm:$0xf]
    %v88 = vld [vmem:[%s3 + $0x10] sm:$0xf]
    %v89 = vld [vmem:[%s3 + $0x14] sm:$0xf]
    %v90 = vld [vmem:[%s3 + $0x18] sm:$0xf]
    %v91 = vld [vmem:[%s3 + $0x1c] sm:$0xf]
    %v92 = vld [vmem:[%s3 + $0x20] sm:$0xf]
    %v93 = vld [vmem:[%s3 + $0x24] sm:$0xf]
    %v94 = vld [vmem:[%s3 + $0x28] sm:$0xf]
    %v95 = vld [vmem:[%s3 + $0x2c] sm:$0xf]
    %v96 = vld [vmem:[%s3 + $0x30] sm:$0xf]
    %v97 = vld [vmem:[%s3 + $0x34] sm:$0xf]
    %v98 = vld [vmem:[%s3 + $0x38] sm:$0xf]
    %v99 = vld [vmem:[%s3 + $0x3c] sm:$0xf]
    %v100 = vld [vmem:[%s4] sm:$0x1]
    %v102 = vperm.slane %v100, 0
    %v120 = vunpack.c.l.b16 %v84
    %v121 = vunpack.c.l.b16 %v85
    %v122 = vunpack.c.l.b16 %v86
    %v123 = vunpack.c.l.b16 %v87
    %v124 = vunpack.c.l.b16 %v88
    %v125 = vunpack.c.l.b16 %v89
    %v126 = vunpack.c.l.b16 %v90
    %v127 = vunpack.c.l.b16 %v91
    %v128 = vunpack.c.l.b16 %v92
    %v129 = vunpack.c.l.b16 %v93
    %v130 = vunpack.c.l.b16 %v94
    %v131 = vunpack.c.l.b16 %v95
    %v132 = vunpack.c.l.b16 %v96
    %v133 = vunpack.c.l.b16 %v97
    %v134 = vunpack.c.l.b16 %v98
    %v135 = vunpack.c.l.b16 %v99
    %v136 = vpack.c.b16 %v121, %v120
    %v137 = vpack.c.b16 %v123, %v122
    %v138 = vpack.c.b16 %v125, %v124
    %v139 = vpack.c.b16 %v127, %v126
    %v140 = vpack.c.b16 %v129, %v128
    %v141 = vpack.c.b16 %v131, %v130
    %v142 = vpack.c.b16 %v133, %v132
    %v143 = vpack.c.b16 %v135, %v134
    %152 = vmatpush.bf16.msra.mxu0 %v143
    %153 = vmatpush.bf16.msra.mxu0 %v142
    %154 = vmatpush.bf16.msra.mxu0 %v141
    %155 = vmatpush.bf16.msra.mxu0 %v140
    %156 = vmatpush.bf16.msra.mxu0 %v139
    %157 = vmatpush.bf16.msra.mxu0 %v138
    %158 = vmatpush.bf16.msra.mxu0 %v137
    %159 = vmatpush.bf16.msra.mxu0 %v136
    %160 = vmatmul.bf16.gmra.mxu0 %v83
    %v161 = vpop.f32.mrf.mxu0
    %v162 = vadd.f32 %v102, %v161
    %v163 = vpop.f32.mrf.mxu0
    %164 = vdwg.mxu0
    %v165 = vmax.f32 %v162, 0.0
    %v166 = vpack.c.bf16 %v165, %v165
    %v167 = vld [vmem:[%s5] sm:$0xf]
    %v168 = vld [vmem:[%s5 + $0x4] sm:$0xf]
    %v169 = vld [vmem:[%s5 + $0x8] sm:$0xf]
    %v170 = vld [vmem:[%s5 + $0xc] sm:$0xf]
    %v171 = vld [vmem:[%s5 + $0x10] sm:$0xf]
    %v172 = vld [vmem:[%s5 + $0x14] sm:$0xf]
    %v173 = vld [vmem:[%s5 + $0x18] sm:$0xf]
    %v174 = vld [vmem:[%s5 + $0x1c] sm:$0xf]
    %v175 = vld [vmem:[%s5 + $0x20] sm:$0xf]
    %v176 = vld [vmem:[%s5 + $0x24] sm:$0xf]
    %v177 = vld [vmem:[%s5 + $0x28] sm:$0xf]
    %v178 = vld [vmem:[%s5 + $0x2c] sm:$0xf]
    %v179 = vld [vmem:[%s5 + $0x30] sm:$0xf]
    %v180 = vld [vmem:[%s5 + $0x34] sm:$0xf]
    %v181 = vld [vmem:[%s5 + $0x38] sm:$0xf]
    %v182 = vld [vmem:[%s5 + $0x3c] sm:$0xf]
    %v183 = vld [vmem:[%s6] sm:$0x1]
    %v185 = vperm.slane %v183, 0
    %v203 = vunpack.c.l.b16 %v167
    %v204 = vunpack.c.l.b16 %v168
    %v205 = vunpack.c.l.b16 %v169
    %v206 = vunpack.c.l.b16 %v170
    %v207 = vunpack.c.l.b16 %v171
    %v208 = vunpack.c.l.b16 %v172
    %v209 = vunpack.c.l.b16 %v173
    %v210 = vunpack.c.l.b16 %v174
    %v211 = vunpack.c.l.b16 %v175
    %v212 = vunpack.c.l.b16 %v176
    %v213 = vunpack.c.l.b16 %v177
    %v214 = vunpack.c.l.b16 %v178
    %v215 = vunpack.c.l.b16 %v179
    %v216 = vunpack.c.l.b16 %v180
    %v217 = vunpack.c.l.b16 %v181
    %v218 = vunpack.c.l.b16 %v182
    %v219 = vpack.c.b16 %v204, %v203
    %v220 = vpack.c.b16 %v206, %v205
    %v221 = vpack.c.b16 %v208, %v207
    %v222 = vpack.c.b16 %v210, %v209
    %v223 = vpack.c.b16 %v212, %v211
    %v224 = vpack.c.b16 %v214, %v213
    %v225 = vpack.c.b16 %v216, %v215
    %v226 = vpack.c.b16 %v218, %v217
    %235 = vmatpush.bf16.msra.mxu0 %v226
    %236 = vmatpush.bf16.msra.mxu0 %v225
    %237 = vmatpush.bf16.msra.mxu0 %v224
    %238 = vmatpush.bf16.msra.mxu0 %v223
    %239 = vmatpush.bf16.msra.mxu0 %v222
    %240 = vmatpush.bf16.msra.mxu0 %v221
    %241 = vmatpush.bf16.msra.mxu0 %v220
    %242 = vmatpush.bf16.msra.mxu0 %v219
    %243 = vmatmul.bf16.gmra.mxu0 %v166
    %v244 = vpop.f32.mrf.mxu0
    %v245 = vadd.f32 %v185, %v244
    %v246 = vpop.f32.mrf.mxu0
    %247 = vdwg.mxu0
    %vm248 = vcmask 80896
    %249 = vst.msk [vmem:[#allocation5] sm:$0xff] %vm248, %v245
    // Predicated region
    $region34: #{tpu_custom_call.1} parent=1 // pred_check
      _
    $region35: #{tpu_custom_call.1} parent=1 // pred_check_branch
      %251 = sbr.rel (0) target = $region37
    $region36: #{tpu_custom_call.1} parent=1 // pred_region
      %253 = vsyncadd [#allocation4], 0
      %s255 = sshll.u32 [#allocation5], 4
      %s256 = int_to_ptr.vmem [resolvable:$true] %s255
      %s257 = sshll.u32 %s7, 4
      %s258 = int_to_ptr.hbm [resolvable:$true] %s257
      %260 = dma.vmem_to_hbm [thread:$0]  %s256, 128, %s258, [#allocation4]
    $region37: #{tpu_custom_call.1} parent=1 // pred_fallthru
      _
    // Predicated region
    $region38: #{tpu_custom_call.1} parent=1 // pred_check
      _
    $region39: #{tpu_custom_call.1} parent=1 // pred_check_branch
      %262 = sbr.rel (0) target = $region41
    $region40: #{tpu_custom_call.1} parent=1 // pred_region
      %264 = dma.done [#allocation4], 128
    $region41: #{tpu_custom_call.1} parent=1 // pred_fallthru
      _
    %265 = vsyncpa [#allocation3], 1
    %266 = vsyncpa [#allocation4], 1

</llo_original>
